<compile_context>
chip_gen: v7x
topology: tpu7x:2x2x1
jax: 0.10.0
libtpu: 0.0.40
codegen_flags: <defaults>
</compile_context>

<pallas_src>
import functools

import numpy as np
import jax
import jax.numpy as jnp
from jax.experimental import pallas as pl
from jax.experimental.pallas import tpu as pltpu


def make_pe_table(d_model, max_len=5000, dtype=jnp.float32):
    """Sinusoidal positional-encoding buffer, shape (max_len, 1, d_model)."""
    position = np.arange(max_len, dtype=np.float32)[:, None]                 # (max_len, 1)
    div_term = np.exp(
        np.arange(0, d_model, 2, dtype=np.float32) * (-np.log(10000.0) / d_model)
    )                                                                         # (d_model/2,)
    pe = np.zeros((max_len, d_model), dtype=np.float32)
    pe[:, 0::2] = np.sin(position * div_term)
    pe[:, 1::2] = np.cos(position * div_term)
    pe = pe[:, None, :]                                                       # (max_len, 1, d_model)
    return jnp.asarray(pe, dtype=dtype)


# ----------------------------- kernels ------------------------------------ #

def _pe_add_kernel(x_ref, pe_ref, o_ref):
    # x_ref: (TS, B, D); pe_ref: (TS, 1, D) -> sublane broadcast over batch.
    o_ref[...] = x_ref[...] + pe_ref[...]


def _pe_add_dropout_hw_kernel(seed_ref, x_ref, pe_ref, o_ref, *, threshold, inv_keep):
    # TPU path: hardware PRNG, per-tile seed so each tile gets a fresh stream.
    pltpu.prng_seed(seed_ref[0] + pl.program_id(0))
    bits = pltpu.bitcast(pltpu.prng_random_bits(x_ref.shape), jnp.uint32)
    y = x_ref[...] + pe_ref[...]
    keep = bits >= jnp.uint32(threshold)           # P(keep) = 1 - p (2^-32 granularity)
    o_ref[...] = jnp.where(keep, y * inv_keep, jnp.zeros_like(y))


def _pe_add_dropout_bits_kernel(x_ref, pe_ref, bits_ref, o_ref, *, threshold, inv_keep):
    # Non-TPU fallback: random bits are generated outside and streamed in.
    y = x_ref[...] + pe_ref[...]
    keep = bits_ref[...] >= jnp.uint32(threshold)
    o_ref[...] = jnp.where(keep, y * inv_keep, jnp.zeros_like(y))


# ----------------------------- wrapper ------------------------------------ #

def positional_encoding(x, pe, *, seed=0, p_drop=0.1, training=True, seq_tile=None):
    """x: (S, B, D). pe: (max_len, 1, D). Returns dropout(x + pe[:S])."""
    S, B, D = x.shape
    pe_s = pe[:S].astype(x.dtype)                       # (S, 1, D), cast once in the wrapper
    itemsize = jnp.dtype(x.dtype).itemsize

    # Tile only the sequence axis: trailing (B, D) stay whole so the pe
    # broadcast is a plain in-register sublane broadcast and blocks keep a
    # lane-dense last dim.  Target ~2 MiB per x block (512+ rows for typical
    # transformer B*D), which is comfortably roofline-friendly and still fits
    # v7x's 64 MiB VMEM with double buffering.
    if seq_tile is None:
        target_block_bytes = 2 * 1024 * 1024
        seq_tile = max(1, target_block_bytes // max(1, B * D * itemsize))
    ts = int(max(1, min(seq_tile, S)))
    grid = (pl.cdiv(S, ts),)

    x_spec = pl.BlockSpec((ts, B, D), lambda i: (i, 0, 0))
    pe_spec = pl.BlockSpec((ts, 1, D), lambda i: (i, 0, 0))
    bits_spec = pl.BlockSpec((ts, B, D), lambda i: (i, 0, 0))
    out_spec = pl.BlockSpec((ts, B, D), lambda i: (i, 0, 0))
    out_shape = jax.ShapeDtypeStruct((S, B, D), x.dtype)

    on_tpu = jax.default_backend() == "tpu"
    apply_dropout = bool(training) and p_drop > 0.0

    pallas_kwargs = {}
    if on_tpu:
        # VMEM budget: x + out double-buffered, pe block double-buffered, plus
        # headroom for block-sized temporaries (PRNG bits / mask / sum).
        x_blk = ts * B * D * itemsize
        pe_blk = ts * D * itemsize
        vmem_limit = 2 * (2 * x_blk + pe_blk) + 4 * x_blk + (8 << 20)
        vmem_limit = int(min(max(vmem_limit, 32 << 20), 64 << 20))
        pallas_kwargs["compiler_params"] = pltpu.CompilerParams(
            dimension_semantics=("parallel",),       # shard tiles across TCs (v7x)
            vmem_limit_bytes=vmem_limit,
        )

    if not apply_dropout:
        return pl.pallas_call(
            _pe_add_kernel,
            out_shape=out_shape,
            grid=grid,
            in_specs=[x_spec, pe_spec],
            out_specs=out_spec,
            **pallas_kwargs,
        )(x, pe_s)

    threshold = min(int(round(p_drop * 2.0 ** 32)), 2 ** 32 - 1)
    inv_keep = float(1.0 / (1.0 - p_drop))

    if on_tpu:
        kernel = functools.partial(
            _pe_add_dropout_hw_kernel, threshold=threshold, inv_keep=inv_keep
        )
        seed_arr = jnp.asarray([seed], dtype=jnp.int32)
        return pl.pallas_call(
            kernel,
            out_shape=out_shape,
            grid=grid,
            in_specs=[
                pl.BlockSpec(memory_space=pltpu.MemorySpace.SMEM),  # seed scalar
                x_spec,
                pe_spec,
            ],
            out_specs=out_spec,
            **pallas_kwargs,
        )(seed_arr, x, pe_s)

    # Non-TPU backend (e.g. CPU interpret fallback): the TPU PRNG primitives
    # have no lowering there, so draw the bits with jax.random and tile them
    # exactly like x.
    bits = jax.random.bits(jax.random.PRNGKey(seed), (S, B, D), dtype=jnp.uint32)
    kernel = functools.partial(
        _pe_add_dropout_bits_kernel, threshold=threshold, inv_keep=inv_keep
    )
    return pl.pallas_call(
        kernel,
        out_shape=out_shape,
        grid=grid,
        in_specs=[x_spec, pe_spec, bits_spec],
        out_specs=out_spec,
        **pallas_kwargs,
    )(x, pe_s, bits)


# ------------------------------- demo -------------------------------------- #

if __name__ == "__main__":
    # Small shapes: seq=8, batch=2, d_model=32 (d_model must be even).
    S, B, D = 8, 2, 32
    MAX_LEN = 64  # module default is 5000; small buffer for the demo

    key = jax.random.PRNGKey(0)
    x = jax.random.normal(key, (S, B, D), dtype=jnp.float32)
    pe = make_pe_table(D, max_len=MAX_LEN, dtype=jnp.float32)

    ref = np.asarray(x + pe[:S])  # pure-JAX reference for the add

    # Eval mode (dropout = identity): must match exactly.
    out_eval = positional_encoding(x, pe, p_drop=0.1, training=False)
    out_eval = jax.block_until_ready(out_eval)
    np.testing.assert_allclose(np.asarray(out_eval), ref, rtol=1e-6, atol=1e-6)

    # Train mode (dropout active, p=0.1).  Randomness won't bitwise-match
    # torch, but every element must be either 0 or (x + pe)/(1 - p).
    p = 0.1
    out_train = positional_encoding(x, pe, seed=1234, p_drop=p, training=True)
    out_train = jax.block_until_ready(out_train)
    assert out_train.shape == (S, B, D)
    out_np = np.asarray(out_train)
    scaled = ref / (1.0 - p)
    ok = np.isclose(out_np, 0.0, atol=1e-6) | np.isclose(out_np, scaled, rtol=1e-4, atol=1e-6)
    assert bool(ok.all()), "dropout output must be 0 or (x+pe)/(1-p)"

    print("KERNEL_OK")
</pallas_src>

<mosaic_0001>
module attributes {stable_mosaic.version = 11 : i64} {
  func.func @_pe_add_kernel(%arg0: i32, %arg1: memref<8x2x32xf32, #tpu.memory_space<vmem>>, %arg2: memref<8x1x32xf32, #tpu.memory_space<vmem>>, %arg3: memref<8x2x32xf32, #tpu.memory_space<vmem>>) attributes {dimension_semantics = [#tpu.dimension_semantics<arbitrary>], iteration_bounds = array<i64: 1>, scalar_prefetch = 0 : i64, scratch_operands = 0 : i64, tpu.core_type = #tpu.core_type<tc>, window_params = [{transform_indices = @transform_0, window_bounds = array<i64: 8, 2, 32>}, {transform_indices = @transform_1, window_bounds = array<i64: 8, 1, 32>}, {transform_indices = @transform_2, window_bounds = array<i64: 8, 2, 32>}]} {
    %c0 = arith.constant 0 : index
    %c0_0 = arith.constant 0 : index
    %c0_1 = arith.constant 0 : index
    %0 = vector.load %arg1[%c0, %c0_0, %c0_1] : memref<8x2x32xf32, #tpu.memory_space<vmem>>, vector<8x2x32xf32>
    %c0_2 = arith.constant 0 : index
    %c0_3 = arith.constant 0 : index
    %c0_4 = arith.constant 0 : index
    %1 = vector.load %arg2[%c0_2, %c0_3, %c0_4] : memref<8x1x32xf32, #tpu.memory_space<vmem>>, vector<8x1x32xf32>
    %2 = vector.broadcast %1 : vector<8x1x32xf32> to vector<8x2x32xf32>
    %3 = arith.addf %0, %2 : vector<8x2x32xf32>
    %c0_5 = arith.constant 0 : index
    %c0_6 = arith.constant 0 : index
    %c0_7 = arith.constant 0 : index
    %4 = vector.load %arg3[%c0_5, %c0_6, %c0_7] : memref<8x2x32xf32, #tpu.memory_space<vmem>>, vector<8x2x32xf32>
    tpu.vector_store %arg3[%c0_5, %c0_6, %c0_7], %3 {strides = array<i32>} : memref<8x2x32xf32, #tpu.memory_space<vmem>>, vector<8x2x32xf32>,
    return
  }
  func.func @transform_0(%arg0: i32) -> (i32, i32, i32) {
    %c0_i32 = arith.constant 0 : i32
    %c0_i32_0 = arith.constant 0 : i32
    %c0_i32_1 = arith.constant 0 : i32
    return %arg0, %c0_i32, %c0_i32_0 : i32, i32, i32
  }
  func.func @transform_1(%arg0: i32) -> (i32, i32, i32) {
    %c0_i32 = arith.constant 0 : i32
    %c0_i32_0 = arith.constant 0 : i32
    %c0_i32_1 = arith.constant 0 : i32
    return %arg0, %c0_i32, %c0_i32_0 : i32, i32, i32
  }
  func.func @transform_2(%arg0: i32) -> (i32, i32, i32) {
    %c0_i32 = arith.constant 0 : i32
    %c0_i32_0 = arith.constant 0 : i32
    %c0_i32_1 = arith.constant 0 : i32
    return %arg0, %c0_i32, %c0_i32_0 : i32, i32, i32
  }
}

</mosaic_0001>

<llo_original>
// kernel: tpu_custom_call.1
$region0: #{tpu_custom_call.1}
  #allocation0 [shape = 'u32[]', space=smem, size = 0x4, offset = 0x4, fixed_abs, tag = 'smem constant byte address 0x4 - core index']
  #allocation1 [shape = 'u32[144,128]{1,0:T(1,128)}', space=vmem, size = 0x12000, scoped, tag = 'internal scratch']
  %s0 = inlined_call_operand.hbm [shape: f32[8,2,32], index: 0, kind: input, shape index: {}]
  %s1 = inlined_call_operand.hbm [shape: f32[8,1,32], index: 1, kind: input, shape index: {}]
  %s2 = inlined_call_operand.hbm [shape: f32[8,2,32], index: 2, kind: output, shape index: {}]
  %s3 = sld [smem:[#allocation0]]
  $region26: #{tpu_custom_call.1} parent=0
    _
  %s5 = ssub.s32 1, %s3
  %s6 = scalar_select 0, %s5, %s3
  $region1: #{tpu_custom_call.1} parent=0
    #allocation2 [shape = 'u8[8192]{0}', space=vmem, size = 0x2000, scoped, tag = 'input window, operand 0, single buffered']
    #allocation3 [shape = 's32[1]{0}', space=sflag, size = 0x4, scoped, tag = 'scoped memory for tpu_custom_call.1']
    #allocation4 [shape = 's32[1]{0}', space=sflag, size = 0x4, scoped, tag = 'scoped memory for tpu_custom_call.1']
    #allocation5 [shape = 'u8[4096]{0}', space=vmem, size = 0x1000, scoped, tag = 'input window, operand 1, single buffered']
    #allocation6 [shape = 's32[1]{0}', space=sflag, size = 0x4, scoped, tag = 'scoped memory for tpu_custom_call.1']
    #allocation7 [shape = 'u8[8192]{0}', space=vmem, size = 0x2000, scoped, tag = 'output window, operand 0, single buffered']
    %7 = vsyncpa [#allocation3], 0
    %8 = vsyncpa [#allocation6], 0
    %9 = vsyncpa [#allocation4], 0
    // Predicated region
    $region2: #{tpu_custom_call.1} parent=1 // pred_check
      _
    $region3: #{tpu_custom_call.1} parent=1 // pred_check_branch
      %11 = sbr.rel (0) target = $region5
    $region4: #{tpu_custom_call.1} parent=1 // pred_region
      %s13 = ssub.s32 256, 256
      %14 = vsyncadd [#allocation3], %s13
      %s15 = sshll.u32 [#allocation2], 4
      %s16 = int_to_ptr.vmem [resolvable:$true] %s15
      %21 = dma.hbm_to_vmem [thread:$0]  %s0, 256, %s16, [#allocation3], 32, 32, 2
    $region5: #{tpu_custom_call.1} parent=1 // pred_fallthru
      _
    // Predicated region
    $region6: #{tpu_custom_call.1} parent=1 // pred_check
      _
    $region7: #{tpu_custom_call.1} parent=1 // pred_check_branch
      %23 = sbr.rel (0) target = $region9
    $region8: #{tpu_custom_call.1} parent=1 // pred_region
      %s25 = ssub.s32 128, 128
      %26 = vsyncadd [#allocation6], %s25
      %s27 = sshll.u32 [#allocation5], 4
      %s28 = int_to_ptr.vmem [resolvable:$true] %s27
      %33 = dma.hbm_to_vmem [thread:$0]  %s1, 128, %s28, [#allocation6], 16, 16, 1
    $region9: #{tpu_custom_call.1} parent=1 // pred_fallthru
      _
    // Predicated region
    $region10: #{tpu_custom_call.1} parent=1 // pred_check
      _
    $region11: #{tpu_custom_call.1} parent=1 // pred_check_branch
      %35 = sbr.rel (0) target = $region13
    $region12: #{tpu_custom_call.1} parent=1 // pred_region
      %36 = dma.done [#allocation3], 256
    $region13: #{tpu_custom_call.1} parent=1 // pred_fallthru
      _
    // Predicated region
    $region14: #{tpu_custom_call.1} parent=1 // pred_check
      _
    $region15: #{tpu_custom_call.1} parent=1 // pred_check_branch
      %38 = sbr.rel (0) target = $region17
    $region16: #{tpu_custom_call.1} parent=1 // pred_region
      %39 = dma.done [#allocation6], 128
    $region17: #{tpu_custom_call.1} parent=1 // pred_fallthru
      _
    %v40 = vld [vmem:[#allocation2] sm:$0x3]
    %v41 = vld [vmem:[#allocation2 + $0x2] sm:$0x3]
    %v42 = vld [vmem:[#allocation2 + $0x4] sm:$0x3]
    %v43 = vld [vmem:[#allocation2 + $0x6] sm:$0x3]
    %v44 = vld [vmem:[#allocation2 + $0x8] sm:$0x3]
    %v45 = vld [vmem:[#allocation2 + $0xa] sm:$0x3]
    %v46 = vld [vmem:[#allocation2 + $0xc] sm:$0x3]
    %v47 = vld [vmem:[#allocation2 + $0xe] sm:$0x3]
    %v48 = vld [vmem:[#allocation5] sm:$0x1]
    %v49 = vld [vmem:[#allocation5 + $0x1] sm:$0x1]
    %v50 = vld [vmem:[#allocation5 + $0x2] sm:$0x1]
    %v51 = vld [vmem:[#allocation5 + $0x3] sm:$0x1]
    %v52 = vld [vmem:[#allocation5 + $0x4] sm:$0x1]
    %v53 = vld [vmem:[#allocation5 + $0x5] sm:$0x1]
    %v54 = vld [vmem:[#allocation5 + $0x6] sm:$0x1]
    %v55 = vld [vmem:[#allocation5 + $0x7] sm:$0x1]
    %v64 = vlaneseq
    %v65 = vshrl.u32 %v64, 7
    %v66 = vsub.s32 0, %v65
    %v67 = vrot.slane %v48, %v66
    %v68 = vlaneseq
    %v69 = vshrl.u32 %v68, 7
    %v70 = vsub.s32 0, %v69
    %v71 = vrot.slane %v49, %v70
    %v72 = vlaneseq
    %v73 = vshrl.u32 %v72, 7
    %v74 = vsub.s32 0, %v73
    %v75 = vrot.slane %v50, %v74
    %v76 = vlaneseq
    %v77 = vshrl.u32 %v76, 7
    %v78 = vsub.s32 0, %v77
    %v79 = vrot.slane %v51, %v78
    %v80 = vlaneseq
    %v81 = vshrl.u32 %v80, 7
    %v82 = vsub.s32 0, %v81
    %v83 = vrot.slane %v52, %v82
    %v84 = vlaneseq
    %v85 = vshrl.u32 %v84, 7
    %v86 = vsub.s32 0, %v85
    %v87 = vrot.slane %v53, %v86
    %v88 = vlaneseq
    %v89 = vshrl.u32 %v88, 7
    %v90 = vsub.s32 0, %v89
    %v91 = vrot.slane %v54, %v90
    %v92 = vlaneseq
    %v93 = vshrl.u32 %v92, 7
    %v94 = vsub.s32 0, %v93
    %v95 = vrot.slane %v55, %v94
    %v104 = vadd.f32 %v40, %v67
    %v105 = vadd.f32 %v41, %v71
    %v106 = vadd.f32 %v42, %v75
    %v107 = vadd.f32 %v43, %v79
    %v108 = vadd.f32 %v44, %v83
    %v109 = vadd.f32 %v45, %v87
    %v110 = vadd.f32 %v46, %v91
    %v111 = vadd.f32 %v47, %v95
    %vm112 = vcmask 254976
    %113 = vst.msk [vmem:[#allocation7] sm:$0x3] %vm112, %v104
    %114 = vst.msk [vmem:[#allocation7 + $0x2] sm:$0x3] %vm112, %v105
    %115 = vst.msk [vmem:[#allocation7 + $0x4] sm:$0x3] %vm112, %v106
    %116 = vst.msk [vmem:[#allocation7 + $0x6] sm:$0x3] %vm112, %v107
    %117 = vst.msk [vmem:[#allocation7 + $0x8] sm:$0x3] %vm112, %v108
    %118 = vst.msk [vmem:[#allocation7 + $0xa] sm:$0x3] %vm112, %v109
    %119 = vst.msk [vmem:[#allocation7 + $0xc] sm:$0x3] %vm112, %v110
    %120 = vst.msk [vmem:[#allocation7 + $0xe] sm:$0x3] %vm112, %v111
    // Predicated region
    $region18: #{tpu_custom_call.1} parent=1 // pred_check
      _
    $region19: #{tpu_custom_call.1} parent=1 // pred_check_branch
      %122 = sbr.rel (0) target = $region21
    $region20: #{tpu_custom_call.1} parent=1 // pred_region
      %s124 = ssub.s32 256, 256
      %125 = vsyncadd [#allocation4], %s124
      %s126 = sshll.u32 [#allocation7], 4
      %s127 = int_to_ptr.vmem [resolvable:$true] %s126
      %132 = dma.vmem_to_hbm [thread:$0]  %s127, 256, %s2, [#allocation4], 32, 32, 2
    $region21: #{tpu_custom_call.1} parent=1 // pred_fallthru
      _
    // Predicated region
    $region22: #{tpu_custom_call.1} parent=1 // pred_check
      _
    $region23: #{tpu_custom_call.1} parent=1 // pred_check_branch
      %134 = sbr.rel (0) target = $region25
    $region24: #{tpu_custom_call.1} parent=1 // pred_region
      %135 = dma.done [#allocation4], 256
    $region25: #{tpu_custom_call.1} parent=1 // pred_fallthru
      _
    %136 = vsyncpa [#allocation3], 1
    %137 = vsyncpa [#allocation6], 1
    %138 = vsyncpa [#allocation4], 1

</llo_original>
